<compile_context>
chip_gen: v7x
topology: tpu7x:2x2x1
jax: 0.10.0
libtpu: 0.0.40
codegen_flags: <defaults>
</compile_context>

<pallas_src>
import functools

import jax
import jax.numpy as jnp
from jax.experimental import pallas as pl
from jax.experimental.pallas import tpu as pltpu

_SMALL_BATCH_THRESHOLD = 512
_DEFAULT_SCOPED_VMEM = 14 << 20  # stay below v5e's 16 MiB default before flagging


def linear_kernel(x_ref, wt_ref, o_ref):
    # x arrives as f32 straight from HBM (no wrapper-side astype); cast to the
    # weight's compute dtype on the VPU (free under the DMA bottleneck), run one
    # MXU matmul with f32 accumulation, and store the narrow (tb, N) result.
    x = x_ref[...].astype(wt_ref.dtype)
    o_ref[...] = jnp.dot(
        x, wt_ref[...], preferred_element_type=jnp.float32
    ).astype(o_ref.dtype)


def prepare_weight(weight, compute_dtype=jnp.bfloat16):
    """One-time weight prep, hoisted off the forward path.

    PyTorch layout (output_dim, input_dim) -> (input_dim, output_dim), cast to
    the compute dtype. No padding: the kernel's weight/output blocks use the
    full (unpadded) N extent, which satisfies the (8,128) BlockSpec rule.
    """
    return weight.T.astype(compute_dtype)  # (input_dim, output_dim)


def _estimate_vmem_bytes(tb, k, n, x_itemsize, w_itemsize, out_itemsize):
    # BlockSpec double-buffers every operand.
    return 2 * (tb * k * x_itemsize) + 2 * (tb * n * out_itemsize) + 2 * (k * n * w_itemsize)


@functools.partial(jax.jit, static_argnames=("batch_tile", "use_pallas"))
def linear_classifier_forward(x, wt, *, batch_tile=2048, use_pallas=None):
    """x: (B, input_dim) f32; wt: (input_dim, output_dim) from prepare_weight().

    Returns (B, output_dim) float32.
    batch_tile tuning guide: 2048 everywhere is safe; 4096 on v6e/v7x (the
    wrapper raises vmem_limit_bytes automatically when needed).
    """
    B, input_dim = x.shape
    _, output_dim = wt.shape

    if use_pallas is None:
        use_pallas = B >= _SMALL_BATCH_THRESHOLD
    if not use_pallas:
        # Tiny batches: XLA's fused GEMM beats the fixed pallas_call launch cost.
        return jnp.dot(x.astype(wt.dtype), wt, preferred_element_type=jnp.float32)

    tb = B if B <= batch_tile else batch_tile
    grid = (pl.cdiv(B, tb),)

    vmem_needed = _estimate_vmem_bytes(
        tb, input_dim, output_dim,
        x.dtype.itemsize, wt.dtype.itemsize, jnp.dtype(jnp.float32).itemsize,
    )
    compiler_kwargs = dict(dimension_semantics=("parallel",))
    if vmem_needed > _DEFAULT_SCOPED_VMEM:
        # Large tile sweeps (e.g. tb=4096 with f32 x) overshoot the default
        # scoped VMEM limit on some chips; request just what we need + headroom.
        compiler_kwargs["vmem_limit_bytes"] = int(vmem_needed + (4 << 20))

    return pl.pallas_call(
        linear_kernel,
        out_shape=jax.ShapeDtypeStruct((B, output_dim), jnp.float32),
        grid_spec=pltpu.PrefetchScalarGridSpec(
            num_scalar_prefetch=0,
            grid=grid,
            in_specs=[
                # x: tiled over batch -> double-buffered DMA overlapped with MXU.
                # Last dim == full array dim, so (8,128) divisibility is waived.
                pl.BlockSpec((tb, input_dim), lambda i: (i, 0)),
                # weight: constant index_map -> VMEM-resident across the grid.
                pl.BlockSpec((input_dim, output_dim), lambda i: (0, 0)),
            ],
            # Narrow output: full N extent (10) -> no padded slab, no post-slice.
            out_specs=pl.BlockSpec((tb, output_dim), lambda i: (i, 0)),
        ),
        compiler_params=pltpu.CompilerParams(**compiler_kwargs),
    )(x, wt)


if __name__ == "__main__":
    input_dim = 28 * 28   # 784
    output_dim = 10

    key = jax.random.PRNGKey(0)
    kx, kw, kx2 = jax.random.split(key, 3)

    # torch.nn.Linear-style uniform(-1/sqrt(fan_in), 1/sqrt(fan_in)) init.
    bound = 1.0 / (input_dim ** 0.5)
    weight = jax.random.uniform(
        kw, (output_dim, input_dim), dtype=jnp.float32, minval=-bound, maxval=bound
    )
    wt = prepare_weight(weight)  # one-time transpose + bf16 cast

    # Case 1: tiny batch (single grid step) -- force the Pallas path to exercise
    # the kernel (production dispatch would use the plain jnp.dot path here).
    batch = 8
    x = jax.random.normal(kx, (batch, input_dim), dtype=jnp.float32)
    out = jax.block_until_ready(
        linear_classifier_forward(x, wt, use_pallas=True)
    )
    ref = x @ weight.T
    assert out.shape == (batch, output_dim)
    assert jnp.allclose(out, ref, atol=2e-2, rtol=2e-2), float(
        jnp.max(jnp.abs(out - ref))
    )

    # Case 2: small multi-tile batch to exercise the pipelined grid (4 steps).
    batch2, tile2 = 256, 64
    x2 = jax.random.normal(kx2, (batch2, input_dim), dtype=jnp.float32)
    out2 = jax.block_until_ready(
        linear_classifier_forward(x2, wt, batch_tile=tile2, use_pallas=True)
    )
    ref2 = x2 @ weight.T
    assert out2.shape == (batch2, output_dim)
    assert jnp.allclose(out2, ref2, atol=2e-2, rtol=2e-2), float(
        jnp.max(jnp.abs(out2 - ref2))
    )

    print("KERNEL_OK")
</pallas_src>

<mosaic_0001>
module attributes {stable_mosaic.version = 11 : i64} {
  func.func @linear_kernel(%arg0: i32, %arg1: memref<8x784xf32, #tpu.memory_space<vmem>>, %arg2: memref<784x10xbf16, #tpu.memory_space<vmem>>, %arg3: memref<8x10xf32, #tpu.memory_space<vmem>>) attributes {dimension_semantics = [#tpu.dimension_semantics<parallel>], iteration_bounds = array<i64: 1>, scalar_prefetch = 0 : i64, scratch_operands = 0 : i64, tpu.core_type = #tpu.core_type<tc>, window_params = [{transform_indices = @transform_0, window_bounds = array<i64: 8, 784>}, {pipeline_mode = #tpu.pipeline_mode<synchronous>, transform_indices = @transform_1, window_bounds = array<i64: 784, 10>}, {transform_indices = @transform_2, window_bounds = array<i64: 8, 10>}]} {
    %c0 = arith.constant 0 : index
    %c0_0 = arith.constant 0 : index
    %0 = vector.load %arg1[%c0, %c0_0] : memref<8x784xf32, #tpu.memory_space<vmem>>, vector<8x784xf32>
    %1 = arith.truncf %0 : vector<8x784xf32> to vector<8x784xbf16>
    %c0_1 = arith.constant 0 : index
    %c0_2 = arith.constant 0 : index
    %2 = vector.load %arg2[%c0_1, %c0_2] : memref<784x10xbf16, #tpu.memory_space<vmem>>, vector<784x10xbf16>
    %cst = arith.constant dense<0.000000e+00> : vector<8x10xf32>
    %3 = tpu.matmul %1, %2, %cst {dimension_numbers = #tpu.dot_dimension_numbers<[1], [0], [0], [1], [0, 0, 1, 1], [], []>} : vector<8x784xbf16>, vector<784x10xbf16>, vector<8x10xf32> -> vector<8x10xf32>
    %c0_3 = arith.constant 0 : index
    %c0_4 = arith.constant 0 : index
    %4 = vector.load %arg3[%c0_3, %c0_4] : memref<8x10xf32, #tpu.memory_space<vmem>>, vector<8x10xf32>
    tpu.vector_store %arg3[%c0_3, %c0_4], %3 {strides = array<i32>} : memref<8x10xf32, #tpu.memory_space<vmem>>, vector<8x10xf32>,
    return
  }
  func.func @transform_0(%arg0: i32) -> (i32, i32) {
    %c0_i32 = arith.constant 0 : i32
    %c0_i32_0 = arith.constant 0 : i32
    return %arg0, %c0_i32 : i32, i32
  }
  func.func @transform_1(%arg0: i32) -> (i32, i32) {
    %c0_i32 = arith.constant 0 : i32
    %c0_i32_0 = arith.constant 0 : i32
    %c0_i32_1 = arith.constant 0 : i32
    return %c0_i32, %c0_i32_0 : i32, i32
  }
  func.func @transform_2(%arg0: i32) -> (i32, i32) {
    %c0_i32 = arith.constant 0 : i32
    %c0_i32_0 = arith.constant 0 : i32
    return %arg0, %c0_i32 : i32, i32
  }
}

</mosaic_0001>

<llo_original>
// kernel: linear_classifier_forward.1
$region0: #{linear_classifier_forward.1}
  #allocation0 [shape = 'u32[]', space=smem, size = 0x4, offset = 0x4, fixed_abs, tag = 'smem constant byte address 0x4 - core index']
  #allocation1 [shape = 'u32[144,128]{1,0:T(1,128)}', space=vmem, size = 0x12000, scoped, tag = 'internal scratch']
  %s0 = inlined_call_operand.vmem [shape: f32[8,784], index: 0, kind: input, shape index: {}]
  %s1 = inlined_call_operand.vmem [shape: bf16[784,10], index: 1, kind: input, shape index: {}]
  %s2 = inlined_call_operand.hbm [shape: f32[8,10], index: 2, kind: output, shape index: {}]
  %s3 = sld [smem:[#allocation0]]
  $region18: #{linear_classifier_forward.1} parent=0
    _
  %s5 = ssub.s32 1, %s3
  %s6 = scalar_select 0, %s5, %s3
  $region1: #{linear_classifier_forward.1} parent=0
    #allocation2 [shape = 'u8[4096]{0}', space=vmem, size = 0x1000, scoped, tag = 'output window, operand 0, single buffered']
    #allocation3 [shape = 's32[1]{0}', space=sflag, size = 0x4, scoped, tag = 'scoped memory for linear_classifier_forward.1']
    %7 = vsyncpa [#allocation3], 0
    // Predicated region
    $region2: #{linear_classifier_forward.1} parent=1 // pred_check
      _
    $region3: #{linear_classifier_forward.1} parent=1 // pred_check_branch
      %9 = sbr.rel (0) target = $region5
    $region4: #{linear_classifier_forward.1} parent=1 // pred_region
      _
    $region5: #{linear_classifier_forward.1} parent=1 // pred_fallthru
      _
    // Predicated region
    $region6: #{linear_classifier_forward.1} parent=1 // pred_check
      _
    $region7: #{linear_classifier_forward.1} parent=1 // pred_check_branch
      %11 = sbr.rel (0) target = $region9
    $region8: #{linear_classifier_forward.1} parent=1 // pred_region
      _
    $region9: #{linear_classifier_forward.1} parent=1 // pred_fallthru
      _
    %v13 = vld [vmem:[%s0] sm:$0xff]
    %v14 = vld [vmem:[%s0 + $0x8] sm:$0xff]
    %v15 = vld [vmem:[%s0 + $0x10] sm:$0xff]
    %v16 = vld [vmem:[%s0 + $0x18] sm:$0xff]
    %v17 = vld [vmem:[%s0 + $0x20] sm:$0xff]
    %v18 = vld [vmem:[%s0 + $0x28] sm:$0xff]
    %v19 = vld [vmem:[%s0 + $0x30] sm:$0xff]
    %v20 = vpack.c.bf16 %v13, %v13
    %v21 = vpack.c.bf16 %v14, %v14
    %v22 = vpack.c.bf16 %v15, %v15
    %v23 = vpack.c.bf16 %v16, %v16
    %v24 = vpack.c.bf16 %v17, %v17
    %v25 = vpack.c.bf16 %v18, %v18
    %v26 = vpack.c.bf16 %v19, %v19
    %v27 = vld [vmem:[%s1] sm:$0xf]
    %v28 = vld [vmem:[%s1 + $0x4] sm:$0xf]
    %v29 = vld [vmem:[%s1 + $0x8] sm:$0xf]
    %v30 = vld [vmem:[%s1 + $0xc] sm:$0xf]
    %v31 = vld [vmem:[%s1 + $0x10] sm:$0xf]
    %v32 = vld [vmem:[%s1 + $0x14] sm:$0xf]
    %v33 = vld [vmem:[%s1 + $0x18] sm:$0xf]
    %v34 = vld [vmem:[%s1 + $0x1c] sm:$0xf]
    %v35 = vld [vmem:[%s1 + $0x20] sm:$0xf]
    %v36 = vld [vmem:[%s1 + $0x24] sm:$0xf]
    %v37 = vld [vmem:[%s1 + $0x28] sm:$0xf]
    %v38 = vld [vmem:[%s1 + $0x2c] sm:$0xf]
    %v39 = vld [vmem:[%s1 + $0x30] sm:$0xf]
    %v40 = vld [vmem:[%s1 + $0x34] sm:$0xf]
    %v41 = vld [vmem:[%s1 + $0x38] sm:$0xf]
    %v42 = vld [vmem:[%s1 + $0x3c] sm:$0xf]
    %v43 = vld [vmem:[%s1 + $0x40] sm:$0xf]
    %v44 = vld [vmem:[%s1 + $0x44] sm:$0xf]
    %v45 = vld [vmem:[%s1 + $0x48] sm:$0xf]
    %v46 = vld [vmem:[%s1 + $0x4c] sm:$0xf]
    %v47 = vld [vmem:[%s1 + $0x50] sm:$0xf]
    %v48 = vld [vmem:[%s1 + $0x54] sm:$0xf]
    %v49 = vld [vmem:[%s1 + $0x58] sm:$0xf]
    %v50 = vld [vmem:[%s1 + $0x5c] sm:$0xf]
    %v51 = vld [vmem:[%s1 + $0x60] sm:$0xf]
    %v52 = vld [vmem:[%s1 + $0x64] sm:$0xf]
    %v53 = vld [vmem:[%s1 + $0x68] sm:$0xf]
    %v54 = vld [vmem:[%s1 + $0x6c] sm:$0xf]
    %v55 = vld [vmem:[%s1 + $0x70] sm:$0xf]
    %v56 = vld [vmem:[%s1 + $0x74] sm:$0xf]
    %v57 = vld [vmem:[%s1 + $0x78] sm:$0xf]
    %v58 = vld [vmem:[%s1 + $0x7c] sm:$0xf]
    %v59 = vld [vmem:[%s1 + $0x80] sm:$0xf]
    %v60 = vld [vmem:[%s1 + $0x84] sm:$0xf]
    %v61 = vld [vmem:[%s1 + $0x88] sm:$0xf]
    %v62 = vld [vmem:[%s1 + $0x8c] sm:$0xf]
    %v63 = vld [vmem:[%s1 + $0x90] sm:$0xf]
    %v64 = vld [vmem:[%s1 + $0x94] sm:$0xf]
    %v65 = vld [vmem:[%s1 + $0x98] sm:$0xf]
    %v66 = vld [vmem:[%s1 + $0x9c] sm:$0xf]
    %v67 = vld [vmem:[%s1 + $0xa0] sm:$0xf]
    %v68 = vld [vmem:[%s1 + $0xa4] sm:$0xf]
    %v69 = vld [vmem:[%s1 + $0xa8] sm:$0xf]
    %v70 = vld [vmem:[%s1 + $0xac] sm:$0xf]
    %v71 = vld [vmem:[%s1 + $0xb0] sm:$0xf]
    %v72 = vld [vmem:[%s1 + $0xb4] sm:$0xf]
    %v73 = vld [vmem:[%s1 + $0xb8] sm:$0xf]
    %v74 = vld [vmem:[%s1 + $0xbc] sm:$0xf]
    %v75 = vld [vmem:[%s1 + $0xc0] sm:$0xf]
    %v76 = vld [vmem:[%s1 + $0xc4] sm:$0xf]
    %v77 = vld [vmem:[%s1 + $0xc8] sm:$0xf]
    %v78 = vld [vmem:[%s1 + $0xcc] sm:$0xf]
    %v79 = vld [vmem:[%s1 + $0xd0] sm:$0xf]
    %v80 = vld [vmem:[%s1 + $0xd4] sm:$0xf]
    %v81 = vld [vmem:[%s1 + $0xd8] sm:$0xf]
    %v82 = vld [vmem:[%s1 + $0xdc] sm:$0xf]
    %v83 = vld [vmem:[%s1 + $0xe0] sm:$0xf]
    %v84 = vld [vmem:[%s1 + $0xe4] sm:$0xf]
    %v85 = vld [vmem:[%s1 + $0xe8] sm:$0xf]
    %v86 = vld [vmem:[%s1 + $0xec] sm:$0xf]
    %v87 = vld [vmem:[%s1 + $0xf0] sm:$0xf]
    %v88 = vld [vmem:[%s1 + $0xf4] sm:$0xf]
    %v89 = vld [vmem:[%s1 + $0xf8] sm:$0xf]
    %v90 = vld [vmem:[%s1 + $0xfc] sm:$0xf]
    %v91 = vld [vmem:[%s1 + $0x100] sm:$0xf]
    %v92 = vld [vmem:[%s1 + $0x104] sm:$0xf]
    %v93 = vld [vmem:[%s1 + $0x108] sm:$0xf]
    %v94 = vld [vmem:[%s1 + $0x10c] sm:$0xf]
    %v95 = vld [vmem:[%s1 + $0x110] sm:$0xf]
    %v96 = vld [vmem:[%s1 + $0x114] sm:$0xf]
    %v97 = vld [vmem:[%s1 + $0x118] sm:$0xf]
    %v98 = vld [vmem:[%s1 + $0x11c] sm:$0xf]
    %v99 = vld [vmem:[%s1 + $0x120] sm:$0xf]
    %v100 = vld [vmem:[%s1 + $0x124] sm:$0xf]
    %v101 = vld [vmem:[%s1 + $0x128] sm:$0xf]
    %v102 = vld [vmem:[%s1 + $0x12c] sm:$0xf]
    %v103 = vld [vmem:[%s1 + $0x130] sm:$0xf]
    %v104 = vld [vmem:[%s1 + $0x134] sm:$0xf]
    %v105 = vld [vmem:[%s1 + $0x138] sm:$0xf]
    %v106 = vld [vmem:[%s1 + $0x13c] sm:$0xf]
    %v107 = vld [vmem:[%s1 + $0x140] sm:$0xf]
    %v108 = vld [vmem:[%s1 + $0x144] sm:$0xf]
    %v109 = vld [vmem:[%s1 + $0x148] sm:$0xf]
    %v110 = vld [vmem:[%s1 + $0x14c] sm:$0xf]
    %v111 = vld [vmem:[%s1 + $0x150] sm:$0xf]
    %v112 = vld [vmem:[%s1 + $0x154] sm:$0xf]
    %v113 = vld [vmem:[%s1 + $0x158] sm:$0xf]
    %v114 = vld [vmem:[%s1 + $0x15c] sm:$0xf]
    %v115 = vld [vmem:[%s1 + $0x160] sm:$0xf]
    %v116 = vld [vmem:[%s1 + $0x164] sm:$0xf]
    %v117 = vld [vmem:[%s1 + $0x168] sm:$0xf]
    %v118 = vld [vmem:[%s1 + $0x16c] sm:$0xf]
    %v119 = vld [vmem:[%s1 + $0x170] sm:$0xf]
    %v120 = vld [vmem:[%s1 + $0x174] sm:$0xf]
    %v121 = vld [vmem:[%s1 + $0x178] sm:$0xf]
    %v122 = vld [vmem:[%s1 + $0x17c] sm:$0xf]
    %v123 = vld [vmem:[%s1 + $0x180] sm:$0xf]
    %v124 = vld [vmem:[%s1 + $0x184] sm:$0xf]
    %v223 = vunpack.c.l.b16 %v27
    %v224 = vunpack.c.l.b16 %v28
    %v225 = vunpack.c.l.b16 %v29
    %v226 = vunpack.c.l.b16 %v30
    %v227 = vunpack.c.l.b16 %v31
    %v228 = vunpack.c.l.b16 %v32
    %v229 = vunpack.c.l.b16 %v33
    %v230 = vunpack.c.l.b16 %v34
    %v231 = vunpack.c.l.b16 %v35
    %v232 = vunpack.c.l.b16 %v36
    %v233 = vunpack.c.l.b16 %v37
    %v234 = vunpack.c.l.b16 %v38
    %v235 = vunpack.c.l.b16 %v39
    %v236 = vunpack.c.l.b16 %v40
    %v237 = vunpack.c.l.b16 %v41
    %v238 = vunpack.c.l.b16 %v42
    %v239 = vunpack.c.l.b16 %v43
    %v240 = vunpack.c.l.b16 %v44
    %v241 = vunpack.c.l.b16 %v45
    %v242 = vunpack.c.l.b16 %v46
    %v243 = vunpack.c.l.b16 %v47
    %v244 = vunpack.c.l.b16 %v48
    %v245 = vunpack.c.l.b16 %v49
    %v246 = vunpack.c.l.b16 %v50
    %v247 = vunpack.c.l.b16 %v51
    %v248 = vunpack.c.l.b16 %v52
    %v249 = vunpack.c.l.b16 %v53
    %v250 = vunpack.c.l.b16 %v54
    %v251 = vunpack.c.l.b16 %v55
    %v252 = vunpack.c.l.b16 %v56
    %v253 = vunpack.c.l.b16 %v57
    %v254 = vunpack.c.l.b16 %v58
    %v255 = vunpack.c.l.b16 %v59
    %v256 = vunpack.c.l.b16 %v60
    %v257 = vunpack.c.l.b16 %v61
    %v258 = vunpack.c.l.b16 %v62
    %v259 = vunpack.c.l.b16 %v63
    %v260 = vunpack.c.l.b16 %v64
    %v261 = vunpack.c.l.b16 %v65
    %v262 = vunpack.c.l.b16 %v66
    %v263 = vunpack.c.l.b16 %v67
    %v264 = vunpack.c.l.b16 %v68
    %v265 = vunpack.c.l.b16 %v69
    %v266 = vunpack.c.l.b16 %v70
    %v267 = vunpack.c.l.b16 %v71
    %v268 = vunpack.c.l.b16 %v72
    %v269 = vunpack.c.l.b16 %v73
    %v270 = vunpack.c.l.b16 %v74
    %v271 = vunpack.c.l.b16 %v75
    %v272 = vunpack.c.l.b16 %v76
    %v273 = vunpack.c.l.b16 %v77
    %v274 = vunpack.c.l.b16 %v78
    %v275 = vunpack.c.l.b16 %v79
    %v276 = vunpack.c.l.b16 %v80
    %v277 = vunpack.c.l.b16 %v81
    %v278 = vunpack.c.l.b16 %v82
    %v279 = vunpack.c.l.b16 %v83
    %v280 = vunpack.c.l.b16 %v84
    %v281 = vunpack.c.l.b16 %v85
    %v282 = vunpack.c.l.b16 %v86
    %v283 = vunpack.c.l.b16 %v87
    %v284 = vunpack.c.l.b16 %v88
    %v285 = vunpack.c.l.b16 %v89
    %v286 = vunpack.c.l.b16 %v90
    %v287 = vunpack.c.l.b16 %v91
    %v288 = vunpack.c.l.b16 %v92
    %v289 = vunpack.c.l.b16 %v93
    %v290 = vunpack.c.l.b16 %v94
    %v291 = vunpack.c.l.b16 %v95
    %v292 = vunpack.c.l.b16 %v96
    %v293 = vunpack.c.l.b16 %v97
    %v294 = vunpack.c.l.b16 %v98
    %v295 = vunpack.c.l.b16 %v99
    %v296 = vunpack.c.l.b16 %v100
    %v297 = vunpack.c.l.b16 %v101
    %v298 = vunpack.c.l.b16 %v102
    %v299 = vunpack.c.l.b16 %v103
    %v300 = vunpack.c.l.b16 %v104
    %v301 = vunpack.c.l.b16 %v105
    %v302 = vunpack.c.l.b16 %v106
    %v303 = vunpack.c.l.b16 %v107
    %v304 = vunpack.c.l.b16 %v108
    %v305 = vunpack.c.l.b16 %v109
    %v306 = vunpack.c.l.b16 %v110
    %v307 = vunpack.c.l.b16 %v111
    %v308 = vunpack.c.l.b16 %v112
    %v309 = vunpack.c.l.b16 %v113
    %v310 = vunpack.c.l.b16 %v114
    %v311 = vunpack.c.l.b16 %v115
    %v312 = vunpack.c.l.b16 %v116
    %v313 = vunpack.c.l.b16 %v117
    %v314 = vunpack.c.l.b16 %v118
    %v315 = vunpack.c.l.b16 %v119
    %v316 = vunpack.c.l.b16 %v120
    %v317 = vunpack.c.l.b16 %v121
    %v318 = vunpack.c.l.b16 %v122
    %v319 = vunpack.c.l.b16 %v123
    %v320 = vunpack.c.l.b16 %v124
    %v321 = vpack.c.b16 %v224, %v223
    %v322 = vpack.c.b16 %v226, %v225
    %v323 = vpack.c.b16 %v228, %v227
    %v324 = vpack.c.b16 %v230, %v229
    %v325 = vpack.c.b16 %v232, %v231
    %v326 = vpack.c.b16 %v234, %v233
    %v327 = vpack.c.b16 %v236, %v235
    %v328 = vpack.c.b16 %v238, %v237
    %v329 = vpack.c.b16 %v240, %v239
    %v330 = vpack.c.b16 %v242, %v241
    %v331 = vpack.c.b16 %v244, %v243
    %v332 = vpack.c.b16 %v246, %v245
    %v333 = vpack.c.b16 %v248, %v247
    %v334 = vpack.c.b16 %v250, %v249
    %v335 = vpack.c.b16 %v252, %v251
    %v336 = vpack.c.b16 %v254, %v253
    %v337 = vpack.c.b16 %v256, %v255
    %v338 = vpack.c.b16 %v258, %v257
    %v339 = vpack.c.b16 %v260, %v259
    %v340 = vpack.c.b16 %v262, %v261
    %v341 = vpack.c.b16 %v264, %v263
    %v342 = vpack.c.b16 %v266, %v265
    %v343 = vpack.c.b16 %v268, %v267
    %v344 = vpack.c.b16 %v270, %v269
    %v345 = vpack.c.b16 %v272, %v271
    %v346 = vpack.c.b16 %v274, %v273
    %v347 = vpack.c.b16 %v276, %v275
    %v348 = vpack.c.b16 %v278, %v277
    %v349 = vpack.c.b16 %v280, %v279
    %v350 = vpack.c.b16 %v282, %v281
    %v351 = vpack.c.b16 %v284, %v283
    %v352 = vpack.c.b16 %v286, %v285
    %v353 = vpack.c.b16 %v288, %v287
    %v354 = vpack.c.b16 %v290, %v289
    %v355 = vpack.c.b16 %v292, %v291
    %v356 = vpack.c.b16 %v294, %v293
    %v357 = vpack.c.b16 %v296, %v295
    %v358 = vpack.c.b16 %v298, %v297
    %v359 = vpack.c.b16 %v300, %v299
    %v360 = vpack.c.b16 %v302, %v301
    %v361 = vpack.c.b16 %v304, %v303
    %v362 = vpack.c.b16 %v306, %v305
    %v363 = vpack.c.b16 %v308, %v307
    %v364 = vpack.c.b16 %v310, %v309
    %v365 = vpack.c.b16 %v312, %v311
    %v366 = vpack.c.b16 %v314, %v313
    %v367 = vpack.c.b16 %v316, %v315
    %v368 = vpack.c.b16 %v318, %v317
    %v369 = vpack.c.b16 %v320, %v319
    %vm419 = vcmask 130048
    %v421 = vsel %vm419, %v26, 0
    %423 = vmatprep.subr.bf16.mxu0 0
    %424 = vmatpush1.bf16.msra.mxu0 %v321
    %425 = vmatprep.subr.bf16.mxu0 0
    %426 = vmatpush1.bf16.msra.mxu0 %v322
    %427 = vmatprep.subr.bf16.mxu0 0
    %428 = vmatpush1.bf16.msra.mxu0 %v323
    %429 = vmatprep.subr.bf16.mxu0 0
    %430 = vmatpush1.bf16.msra.mxu0 %v324
    %431 = vmatprep.subr.bf16.mxu0 0
    %432 = vmatpush1.bf16.msra.mxu0 %v325
    %433 = vmatprep.subr.bf16.mxu0 0
    %434 = vmatpush1.bf16.msra.mxu0 %v326
    %435 = vmatprep.subr.bf16.mxu0 0
    %436 = vmatpush1.bf16.msra.mxu0 %v327
    %437 = vmatprep.subr.bf16.mxu0 0
    %438 = vmatpush1.bf16.msra.mxu0 %v328
    %439 = vmatprep.subr.bf16.mxu0 0
    %440 = vmatpush1.bf16.msra.mxu0 %v329
    %441 = vmatprep.subr.bf16.mxu0 0
    %442 = vmatpush1.bf16.msra.mxu0 %v330
    %443 = vmatprep.subr.bf16.mxu0 0
    %444 = vmatpush1.bf16.msra.mxu0 %v331
    %445 = vmatprep.subr.bf16.mxu0 0
    %446 = vmatpush1.bf16.msra.mxu0 %v332
    %447 = vmatprep.subr.bf16.mxu0 0
    %448 = vmatpush1.bf16.msra.mxu0 %v333
    %449 = vmatprep.subr.bf16.mxu0 0
    %450 = vmatpush1.bf16.msra.mxu0 %v334
    %451 = vmatprep.subr.bf16.mxu0 0
    %452 = vmatpush1.bf16.msra.mxu0 %v335
    %453 = vmatprep.subr.bf16.mxu0 0
    %454 = vmatpush1.bf16.msra.mxu0 %v336
    %455 = vmatprep.mubr.bf16.mxu0 %v21
    %456 = vmatmul.mubr.bf16.gmra.mrb[0].mxu0 %v20
    %v457 = vpop.f32.mrb[0].mxu0
    %v458 = vadd.f32 0.0, %v457
    %v459 = vpop.f32.mrb[0].mxu0
    %v460 = vpop.f32.mrb[0].mxu0
    %v461 = vpop.f32.mrb[0].mxu0
    %462 = vdwg.mxu0
    %463 = vmatprep.subr.bf16.mxu0 0
    %464 = vmatpush1.bf16.msra.mxu0 %v337
    %465 = vmatprep.subr.bf16.mxu0 0
    %466 = vmatpush1.bf16.msra.mxu0 %v338
    %467 = vmatprep.subr.bf16.mxu0 0
    %468 = vmatpush1.bf16.msra.mxu0 %v339
    %469 = vmatprep.subr.bf16.mxu0 0
    %470 = vmatpush1.bf16.msra.mxu0 %v340
    %471 = vmatprep.subr.bf16.mxu0 0
    %472 = vmatpush1.bf16.msra.mxu0 %v341
    %473 = vmatprep.subr.bf16.mxu0 0
    %474 = vmatpush1.bf16.msra.mxu0 %v342
    %475 = vmatprep.subr.bf16.mxu0 0
    %476 = vmatpush1.bf16.msra.mxu0 %v343
    %477 = vmatprep.subr.bf16.mxu0 0
    %478 = vmatpush1.bf16.msra.mxu0 %v344
    %479 = vmatprep.subr.bf16.mxu0 0
    %480 = vmatpush1.bf16.msra.mxu0 %v345
    %481 = vmatprep.subr.bf16.mxu0 0
    %482 = vmatpush1.bf16.msra.mxu0 %v346
    %483 = vmatprep.subr.bf16.mxu0 0
    %484 = vmatpush1.bf16.msra.mxu0 %v347
    %485 = vmatprep.subr.bf16.mxu0 0
    %486 = vmatpush1.bf16.msra.mxu0 %v348
    %487 = vmatprep.subr.bf16.mxu0 0
    %488 = vmatpush1.bf16.msra.mxu0 %v349
    %489 = vmatprep.subr.bf16.mxu0 0
    %490 = vmatpush1.bf16.msra.mxu0 %v350
    %491 = vmatprep.subr.bf16.mxu0 0
    %492 = vmatpush1.bf16.msra.mxu0 %v351
    %493 = vmatprep.subr.bf16.mxu0 0
    %494 = vmatpush1.bf16.msra.mxu0 %v352
    %495 = vmatprep.mubr.bf16.mxu0 %v23
    %496 = vmatmul.mubr.bf16.gmra.mrb[0].mxu0 %v22
    %v497 = vpop.f32.mrb[0].mxu0
    %v498 = vadd.f32 %v458, %v497
    %v499 = vpop.f32.mrb[0].mxu0
    %v500 = vpop.f32.mrb[0].mxu0
    %v501 = vpop.f32.mrb[0].mxu0
    %502 = vdwg.mxu0
    %503 = vmatprep.subr.bf16.mxu0 0
    %504 = vmatpush1.bf16.msra.mxu0 %v353
    %505 = vmatprep.subr.bf16.mxu0 0
    %506 = vmatpush1.bf16.msra.mxu0 %v354
    %507 = vmatprep.subr.bf16.mxu0 0
    %508 = vmatpush1.bf16.msra.mxu0 %v355
    %509 = vmatprep.subr.bf16.mxu0 0
    %510 = vmatpush1.bf16.msra.mxu0 %v356
    %511 = vmatprep.subr.bf16.mxu0 0
    %512 = vmatpush1.bf16.msra.mxu0 %v357
    %513 = vmatprep.subr.bf16.mxu0 0
    %514 = vmatpush1.bf16.msra.mxu0 %v358
    %515 = vmatprep.subr.bf16.mxu0 0
    %516 = vmatpush1.bf16.msra.mxu0 %v359
    %517 = vmatprep.subr.bf16.mxu0 0
    %518 = vmatpush1.bf16.msra.mxu0 %v360
    %519 = vmatprep.subr.bf16.mxu0 0
    %520 = vmatpush1.bf16.msra.mxu0 %v361
    %521 = vmatprep.subr.bf16.mxu0 0
    %522 = vmatpush1.bf16.msra.mxu0 %v362
    %523 = vmatprep.subr.bf16.mxu0 0
    %524 = vmatpush1.bf16.msra.mxu0 %v363
    %525 = vmatprep.subr.bf16.mxu0 0
    %526 = vmatpush1.bf16.msra.mxu0 %v364
    %527 = vmatprep.subr.bf16.mxu0 0
    %528 = vmatpush1.bf16.msra.mxu0 %v365
    %529 = vmatprep.subr.bf16.mxu0 0
    %530 = vmatpush1.bf16.msra.mxu0 %v366
    %531 = vmatprep.subr.bf16.mxu0 0
    %532 = vmatpush1.bf16.msra.mxu0 %v367
    %533 = vmatprep.subr.bf16.mxu0 0
    %534 = vmatpush1.bf16.msra.mxu0 %v368
    %535 = vmatprep.mubr.bf16.mxu0 %v25
    %536 = vmatmul.mubr.bf16.gmra.mrb[0].mxu0 %v24
    %v537 = vpop.f32.mrb[0].mxu0
    %v538 = vadd.f32 %v498, %v537
    %v539 = vpop.f32.mrb[0].mxu0
    %v540 = vpop.f32.mrb[0].mxu0
    %v541 = vpop.f32.mrb[0].mxu0
    %542 = vdwg.mxu0
    %543 = vmatprep.subr.bf16.mxu0 0
    %544 = vmatpush1.bf16.msra.mxu0 %v369
    %545 = vmatprep.subr.bf16.mxu0 0
    %546 = vmatpush1.bf16.msra.mxu0 0
    %547 = vmatprep.subr.bf16.mxu0 0
    %548 = vmatpush1.bf16.msra.mxu0 0
    %549 = vmatprep.subr.bf16.mxu0 0
    %550 = vmatpush1.bf16.msra.mxu0 0
    %551 = vmatprep.subr.bf16.mxu0 0
    %552 = vmatpush1.bf16.msra.mxu0 0
    %553 = vmatprep.subr.bf16.mxu0 0
    %554 = vmatpush1.bf16.msra.mxu0 0
    %555 = vmatprep.subr.bf16.mxu0 0
    %556 = vmatpush1.bf16.msra.mxu0 0
    %557 = vmatprep.subr.bf16.mxu0 0
    %558 = vmatpush1.bf16.msra.mxu0 0
    %559 = vmatprep.subr.bf16.mxu0 0
    %560 = vmatpush1.bf16.msra.mxu0 0
    %561 = vmatprep.subr.bf16.mxu0 0
    %562 = vmatpush1.bf16.msra.mxu0 0
    %563 = vmatprep.subr.bf16.mxu0 0
    %564 = vmatpush1.bf16.msra.mxu0 0
    %565 = vmatprep.subr.bf16.mxu0 0
    %566 = vmatpush1.bf16.msra.mxu0 0
    %567 = vmatprep.subr.bf16.mxu0 0
    %568 = vmatpush1.bf16.msra.mxu0 0
    %569 = vmatprep.subr.bf16.mxu0 0
    %570 = vmatpush1.bf16.msra.mxu0 0
    %571 = vmatprep.subr.bf16.mxu0 0
    %572 = vmatpush1.bf16.msra.mxu0 0
    %573 = vmatprep.subr.bf16.mxu0 0
    %574 = vmatpush1.bf16.msra.mxu0 0
    %575 = vmatprep.mubr.bf16.mxu0 0
    %576 = vmatmul.mubr.bf16.gmra.mrb[0].mxu0 %v421
    %v577 = vpop.f32.mrb[0].mxu0
    %v578 = vadd.f32 %v538, %v577
    %v579 = vpop.f32.mrb[0].mxu0
    %v580 = vpop.f32.mrb[0].mxu0
    %v581 = vpop.f32.mrb[0].mxu0
    %582 = vdwg.mxu0
    %vm583 = vcmask 80896
    %584 = vst.msk [vmem:[#allocation2] sm:$0xff] %vm583, %v578
    // Predicated region
    $region10: #{linear_classifier_forward.1} parent=1 // pred_check
      _
    $region11: #{linear_classifier_forward.1} parent=1 // pred_check_branch
      %586 = sbr.rel (0) target = $region13
    $region12: #{linear_classifier_forward.1} parent=1 // pred_region
      %s588 = ssub.s32 128, 128
      %589 = vsyncadd [#allocation3], %s588
      %s591 = sshll.u32 [#allocation2], 4
      %s592 = int_to_ptr.vmem [resolvable:$true] %s591
      %594 = dma.vmem_to_hbm [thread:$0]  %s592, 128, %s2, [#allocation3]
    $region13: #{linear_classifier_forward.1} parent=1 // pred_fallthru
      _
    // Predicated region
    $region14: #{linear_classifier_forward.1} parent=1 // pred_check
      _
    $region15: #{linear_classifier_forward.1} parent=1 // pred_check_branch
      %596 = sbr.rel (0) target = $region17
    $region16: #{linear_classifier_forward.1} parent=1 // pred_region
      %597 = dma.done [#allocation3], 128
    $region17: #{linear_classifier_forward.1} parent=1 // pred_fallthru
      _
    %598 = vsyncpa [#allocation3], 1

</llo_original>
